<compile_context>
chip_gen: v5e
topology: v5e:2x2
jax: 0.10.0
libtpu: 0.0.40
codegen_flags: <defaults>
</compile_context>

<pallas_src>
import functools

import jax
import jax.numpy as jnp
from jax.experimental import pallas as pl
from jax.experimental.pallas import tpu as pltpu


def _round_up(x: int, m: int) -> int:
    return (x + m - 1) // m * m


def classifier_kernel(x_ref, bb_ref, w1_ref, b1_ref, w2_ref, b2_ref,
                      w3f_ref, w3b_ref, w3a_ref, b3_ref, out_ref):
    # x_ref: (tb, D) f32; normalization already folded into w1/b1.
    x = x_ref[...].astype(jnp.bfloat16)
    h1 = jnp.maximum(
        jnp.dot(x, w1_ref[...], preferred_element_type=jnp.float32)
        + b1_ref[...], 0.0)
    feat = jnp.maximum(
        jnp.dot(h1.astype(jnp.bfloat16), w2_ref[...],
                preferred_element_type=jnp.float32) + b2_ref[...], 0.0)
    logits = jnp.dot(feat.astype(jnp.bfloat16), w3f_ref[...],
                     preferred_element_type=jnp.float32)

    # classifier_head bbox/area contribution, computed in-kernel.
    # K=4 "matmul" expanded as 4 broadcast multiply-adds (pure VPU, free under
    # the DMA-bound regime).
    bbox = bb_ref[...]                                        # (tb, 4) f32
    area = (bbox[:, 2:3] - bbox[:, 0:1]) * (bbox[:, 3:4] - bbox[:, 1:2])
    w3b = w3b_ref[...]                                        # (4, NCp) f32
    head = (bbox[:, 0:1] * w3b[0:1, :]
            + bbox[:, 1:2] * w3b[1:2, :]
            + bbox[:, 2:3] * w3b[2:3, :]
            + bbox[:, 3:4] * w3b[3:4, :]
            + area * w3a_ref[...]
            + b3_ref[...])

    out_ref[...] = logits + head


def prepare_weights(params, H, W):
    """One-time weight prep: fold normalization into w1/b1, pad to 128 lanes,
    cast the matmul weights to bf16. Call once, reuse across forward calls."""
    hw = H * W
    mean_vec = jnp.repeat(params["norm_mean"], hw)                 # [D]
    stdinv_vec = jnp.repeat(1.0 / params["norm_std"], hw)          # [D]
    w1 = stdinv_vec[:, None] * params["w1"]                        # [D, H1]
    b1 = params["b1"] - (mean_vec * stdinv_vec)[None, :] @ params["w1"]

    w2, b2 = params["w2"], params["b2"]
    w3f, w3b, w3a, b3 = (params["w3_feat"], params["w3_bbox"],
                         params["w3_area"], params["b3"])
    H1, F = w2.shape
    NC = b3.shape[-1]
    H1p, Fp, NCp = _round_up(H1, 128), _round_up(F, 128), _round_up(NC, 128)

    return {
        "w1": jnp.pad(w1, ((0, 0), (0, H1p - H1))).astype(jnp.bfloat16),
        "b1": jnp.pad(b1, ((0, 0), (0, H1p - H1))).astype(jnp.float32),
        "w2": jnp.pad(w2, ((0, H1p - H1), (0, Fp - F))).astype(jnp.bfloat16),
        "b2": jnp.pad(b2, ((0, 0), (0, Fp - F))).astype(jnp.float32),
        "w3f": jnp.pad(w3f, ((0, Fp - F), (0, NCp - NC))).astype(jnp.bfloat16),
        "w3b": jnp.pad(w3b, ((0, 0), (0, NCp - NC))).astype(jnp.float32),
        "w3a": jnp.pad(w3a, ((0, 0), (0, NCp - NC))).astype(jnp.float32),
        "b3": jnp.pad(b3, ((0, 0), (0, NCp - NC))).astype(jnp.float32),
    }


def _pick_batch_tile(B: int) -> int:
    # Large tiles amortize ~0.35us/step overhead; cap so the grid has >= 2
    # steps once B allows it (v7x megacore) and the double-buffered f32 x tile
    # stays comfortably inside scoped VMEM (tb=1024, D=1024 -> ~9.5 MiB).
    half = _round_up(pl.cdiv(B, 2), 8)
    return max(8, min(1024, half))


def classifier_forward(subimages, bounding_boxes, prepared, *, num_classes,
                       tb=None):
    B, C, H, W = subimages.shape
    D = C * H * W
    x_flat = subimages.reshape(B, D).astype(jnp.float32)  # channel-major flatten
    bbox = bounding_boxes.astype(jnp.float32)             # [B, 4]

    w1, b1 = prepared["w1"], prepared["b1"]
    w2, b2 = prepared["w2"], prepared["b2"]
    w3f, w3b, w3a, b3 = (prepared["w3f"], prepared["w3b"],
                         prepared["w3a"], prepared["b3"])
    H1p = w1.shape[1]
    Fp = w2.shape[1]
    NCp = b3.shape[1]

    if tb is None:
        tb = _pick_batch_tile(B)
    grid = (pl.cdiv(B, tb),)   # ragged last block: OOB rows masked on store

    out = pl.pallas_call(
        classifier_kernel,
        out_shape=jax.ShapeDtypeStruct((B, NCp), jnp.float32),
        grid=grid,
        in_specs=[
            pl.BlockSpec((tb, D),    lambda i: (i, 0)),   # x   (batch-tiled)
            pl.BlockSpec((tb, 4),    lambda i: (i, 0)),   # bbox(batch-tiled)
            pl.BlockSpec((D, H1p),   lambda i: (0, 0)),   # w1  (resident)
            pl.BlockSpec((1, H1p),   lambda i: (0, 0)),   # b1
            pl.BlockSpec((H1p, Fp),  lambda i: (0, 0)),   # w2
            pl.BlockSpec((1, Fp),    lambda i: (0, 0)),   # b2
            pl.BlockSpec((Fp, NCp),  lambda i: (0, 0)),   # w3_feat
            pl.BlockSpec((4, NCp),   lambda i: (0, 0)),   # w3_bbox
            pl.BlockSpec((1, NCp),   lambda i: (0, 0)),   # w3_area
            pl.BlockSpec((1, NCp),   lambda i: (0, 0)),   # b3
        ],
        out_specs=pl.BlockSpec((tb, NCp), lambda i: (i, 0)),
        compiler_params=pltpu.CompilerParams(
            dimension_semantics=("parallel",)),
    )(x_flat, bbox, w1, b1, w2, b2, w3f, w3b, w3a, b3)

    return out[:, :num_classes]


def reference_forward(subimages, bounding_boxes, params):
    """Pure-JAX f32 reference of the original module forward."""
    B, C, H, W = subimages.shape
    D = C * H * W
    mean_vec = jnp.repeat(params["norm_mean"], H * W)[None, :]
    std_vec = jnp.repeat(params["norm_std"], H * W)[None, :]
    x = (subimages.reshape(B, D) - mean_vec) / std_vec
    h1 = jnp.maximum(x @ params["w1"] + params["b1"], 0.0)
    feat = jnp.maximum(h1 @ params["w2"] + params["b2"], 0.0)
    bbox = bounding_boxes
    area = ((bbox[:, 2] - bbox[:, 0]) * (bbox[:, 3] - bbox[:, 1]))[:, None]
    return (feat @ params["w3_feat"] + bbox @ params["w3_bbox"]
            + area * params["w3_area"] + params["b3"])


def make_params(key, C, H, W, hidden, feat, num_classes):
    D = C * H * W
    keys = jax.random.split(key, 8)
    s = 0.05
    return {
        "norm_mean": jnp.linspace(0.1, 0.5, C).astype(jnp.float32),
        "norm_std": jnp.linspace(0.5, 1.0, C).astype(jnp.float32),
        "w1": s * jax.random.normal(keys[0], (D, hidden), jnp.float32),
        "b1": s * jax.random.normal(keys[1], (1, hidden), jnp.float32),
        "w2": s * jax.random.normal(keys[2], (hidden, feat), jnp.float32),
        "b2": s * jax.random.normal(keys[3], (1, feat), jnp.float32),
        "w3_feat": s * jax.random.normal(keys[4], (feat, num_classes), jnp.float32),
        "w3_bbox": s * jax.random.normal(keys[5], (4, num_classes), jnp.float32),
        "w3_area": s * jax.random.normal(keys[6], (1, num_classes), jnp.float32),
        "b3": s * jax.random.normal(keys[7], (1, num_classes), jnp.float32),
    }


if __name__ == "__main__":
    B, C, H, W = 2, 4, 16, 16
    hidden, feat, num_classes = 32, 16, 8

    root = jax.random.PRNGKey(0)
    k_param, k_img, k_box = jax.random.split(root, 3)

    params = make_params(k_param, C, H, W, hidden, feat, num_classes)
    prepared = prepare_weights(params, H, W)   # one-time weight prep

    subimages = jax.random.normal(k_img, (B, C, H, W), jnp.float32)
    # bounding boxes [x0, y0, x1, y1] with x1 > x0, y1 > y0
    lo = jax.random.uniform(k_box, (B, 2), jnp.float32, 0.0, 0.4)
    hi = lo + jax.random.uniform(jax.random.fold_in(k_box, 1), (B, 2),
                                 jnp.float32, 0.1, 0.5)
    bounding_boxes = jnp.concatenate([lo, hi], axis=-1)  # [B, 4]

    fwd = jax.jit(functools.partial(classifier_forward,
                                    num_classes=num_classes))
    out = fwd(subimages, bounding_boxes, prepared)
    jax.block_until_ready(out)
    assert out.shape == (B, num_classes)
    assert bool(jnp.all(jnp.isfinite(out)))

    # Correctness vs. f32 reference (loose tolerance: bf16 matmul operands).
    ref = reference_forward(subimages, bounding_boxes, params)
    assert bool(jnp.allclose(out, ref, rtol=5e-2, atol=5e-2)), (
        "kernel output diverges from reference")

    print("KERNEL_OK")
</pallas_src>

<mosaic_0001>
module attributes {stable_mosaic.version = 11 : i64} {
  func.func @classifier_kernel(%arg0: i32, %arg1: memref<8x1024xf32, #tpu.memory_space<vmem>>, %arg2: memref<8x4xf32, #tpu.memory_space<vmem>>, %arg3: memref<1024x128xbf16, #tpu.memory_space<vmem>>, %arg4: memref<1x128xf32, #tpu.memory_space<vmem>>, %arg5: memref<128x128xbf16, #tpu.memory_space<vmem>>, %arg6: memref<1x128xf32, #tpu.memory_space<vmem>>, %arg7: memref<128x128xbf16, #tpu.memory_space<vmem>>, %arg8: memref<4x128xf32, #tpu.memory_space<vmem>>, %arg9: memref<1x128xf32, #tpu.memory_space<vmem>>, %arg10: memref<1x128xf32, #tpu.memory_space<vmem>>, %arg11: memref<8x128xf32, #tpu.memory_space<vmem>>) attributes {dimension_semantics = [#tpu.dimension_semantics<parallel>], iteration_bounds = array<i64: 1>, scalar_prefetch = 0 : i64, scratch_operands = 0 : i64, tpu.core_type = #tpu.core_type<tc>, window_params = [{transform_indices = @transform_0, window_bounds = array<i64: 8, 1024>}, {transform_indices = @transform_1, window_bounds = array<i64: 8, 4>}, {pipeline_mode = #tpu.pipeline_mode<synchronous>, transform_indices = @transform_2, window_bounds = array<i64: 1024, 128>}, {pipeline_mode = #tpu.pipeline_mode<synchronous>, transform_indices = @transform_3, window_bounds = array<i64: 1, 128>}, {pipeline_mode = #tpu.pipeline_mode<synchronous>, transform_indices = @transform_4, window_bounds = array<i64: 128, 128>}, {pipeline_mode = #tpu.pipeline_mode<synchronous>, transform_indices = @transform_5, window_bounds = array<i64: 1, 128>}, {pipeline_mode = #tpu.pipeline_mode<synchronous>, transform_indices = @transform_6, window_bounds = array<i64: 128, 128>}, {pipeline_mode = #tpu.pipeline_mode<synchronous>, transform_indices = @transform_7, window_bounds = array<i64: 4, 128>}, {pipeline_mode = #tpu.pipeline_mode<synchronous>, transform_indices = @transform_8, window_bounds = array<i64: 1, 128>}, {pipeline_mode = #tpu.pipeline_mode<synchronous>, transform_indices = @transform_9, window_bounds = array<i64: 1, 128>}, {transform_indices = @transform_10, window_bounds = array<i64: 8, 128>}]} {
    %c0 = arith.constant 0 : index
    %c0_0 = arith.constant 0 : index
    %0 = vector.load %arg1[%c0, %c0_0] : memref<8x1024xf32, #tpu.memory_space<vmem>>, vector<8x1024xf32>
    %1 = arith.truncf %0 : vector<8x1024xf32> to vector<8x1024xbf16>
    %c0_1 = arith.constant 0 : index
    %c0_2 = arith.constant 0 : index
    %2 = vector.load %arg3[%c0_1, %c0_2] : memref<1024x128xbf16, #tpu.memory_space<vmem>>, vector<1024x128xbf16>
    %cst = arith.constant dense<0.000000e+00> : vector<8x128xf32>
    %3 = tpu.matmul %1, %2, %cst {dimension_numbers = #tpu.dot_dimension_numbers<[1], [0], [0], [1], [0, 0, 1, 1], [], []>} : vector<8x1024xbf16>, vector<1024x128xbf16>, vector<8x128xf32> -> vector<8x128xf32>
    %c0_3 = arith.constant 0 : index
    %c0_4 = arith.constant 0 : index
    %4 = vector.load %arg4[%c0_3, %c0_4] : memref<1x128xf32, #tpu.memory_space<vmem>>, vector<1x128xf32>
    %5 = vector.broadcast %4 : vector<1x128xf32> to vector<8x128xf32>
    %6 = arith.addf %3, %5 : vector<8x128xf32>
    %cst_5 = arith.constant 0.000000e+00 : f32
    %7 = vector.broadcast %cst_5 : f32 to vector<8x128xf32>
    %8 = arith.maximumf %6, %7 : vector<8x128xf32>
    %9 = arith.truncf %8 : vector<8x128xf32> to vector<8x128xbf16>
    %c0_6 = arith.constant 0 : index
    %c0_7 = arith.constant 0 : index
    %10 = vector.load %arg5[%c0_6, %c0_7] : memref<128x128xbf16, #tpu.memory_space<vmem>>, vector<128x128xbf16>
    %cst_8 = arith.constant dense<0.000000e+00> : vector<8x128xf32>
    %11 = tpu.matmul %9, %10, %cst_8 {dimension_numbers = #tpu.dot_dimension_numbers<[1], [0], [0], [1], [0, 0, 1, 1], [], []>} : vector<8x128xbf16>, vector<128x128xbf16>, vector<8x128xf32> -> vector<8x128xf32>
    %c0_9 = arith.constant 0 : index
    %c0_10 = arith.constant 0 : index
    %12 = vector.load %arg6[%c0_9, %c0_10] : memref<1x128xf32, #tpu.memory_space<vmem>>, vector<1x128xf32>
    %13 = vector.broadcast %12 : vector<1x128xf32> to vector<8x128xf32>
    %14 = arith.addf %11, %13 : vector<8x128xf32>
    %cst_11 = arith.constant 0.000000e+00 : f32
    %15 = vector.broadcast %cst_11 : f32 to vector<8x128xf32>
    %16 = arith.maximumf %14, %15 : vector<8x128xf32>
    %17 = arith.truncf %16 : vector<8x128xf32> to vector<8x128xbf16>
    %c0_12 = arith.constant 0 : index
    %c0_13 = arith.constant 0 : index
    %18 = vector.load %arg7[%c0_12, %c0_13] : memref<128x128xbf16, #tpu.memory_space<vmem>>, vector<128x128xbf16>
    %cst_14 = arith.constant dense<0.000000e+00> : vector<8x128xf32>
    %19 = tpu.matmul %17, %18, %cst_14 {dimension_numbers = #tpu.dot_dimension_numbers<[1], [0], [0], [1], [0, 0, 1, 1], [], []>} : vector<8x128xbf16>, vector<128x128xbf16>, vector<8x128xf32> -> vector<8x128xf32>
    %c0_15 = arith.constant 0 : index
    %c0_16 = arith.constant 0 : index
    %20 = vector.load %arg2[%c0_15, %c0_16] : memref<8x4xf32, #tpu.memory_space<vmem>>, vector<8x4xf32>
    %21 = vector.extract_strided_slice %20 {offsets = [0, 2], sizes = [8, 1], strides = [1, 1]} : vector<8x4xf32> to vector<8x1xf32>
    %22 = vector.extract_strided_slice %20 {offsets = [0, 0], sizes = [8, 1], strides = [1, 1]} : vector<8x4xf32> to vector<8x1xf32>
    %23 = arith.subf %21, %22 : vector<8x1xf32>
    %24 = vector.extract_strided_slice %20 {offsets = [0, 3], sizes = [8, 1], strides = [1, 1]} : vector<8x4xf32> to vector<8x1xf32>
    %25 = vector.extract_strided_slice %20 {offsets = [0, 1], sizes = [8, 1], strides = [1, 1]} : vector<8x4xf32> to vector<8x1xf32>
    %26 = arith.subf %24, %25 : vector<8x1xf32>
    %27 = arith.mulf %23, %26 : vector<8x1xf32>
    %c0_17 = arith.constant 0 : index
    %c0_18 = arith.constant 0 : index
    %28 = vector.load %arg8[%c0_17, %c0_18] : memref<4x128xf32, #tpu.memory_space<vmem>>, vector<4x128xf32>
    %29 = vector.extract_strided_slice %20 {offsets = [0, 0], sizes = [8, 1], strides = [1, 1]} : vector<8x4xf32> to vector<8x1xf32>
    %30 = vector.extract_strided_slice %28 {offsets = [0, 0], sizes = [1, 128], strides = [1, 1]} : vector<4x128xf32> to vector<1x128xf32>
    %31 = vector.broadcast %29 : vector<8x1xf32> to vector<8x128xf32>
    %32 = vector.broadcast %30 : vector<1x128xf32> to vector<8x128xf32>
    %33 = arith.mulf %31, %32 : vector<8x128xf32>
    %34 = vector.extract_strided_slice %20 {offsets = [0, 1], sizes = [8, 1], strides = [1, 1]} : vector<8x4xf32> to vector<8x1xf32>
    %35 = vector.extract_strided_slice %28 {offsets = [1, 0], sizes = [1, 128], strides = [1, 1]} : vector<4x128xf32> to vector<1x128xf32>
    %36 = vector.broadcast %34 : vector<8x1xf32> to vector<8x128xf32>
    %37 = vector.broadcast %35 : vector<1x128xf32> to vector<8x128xf32>
    %38 = arith.mulf %36, %37 : vector<8x128xf32>
    %39 = arith.addf %33, %38 : vector<8x128xf32>
    %40 = vector.extract_strided_slice %20 {offsets = [0, 2], sizes = [8, 1], strides = [1, 1]} : vector<8x4xf32> to vector<8x1xf32>
    %41 = vector.extract_strided_slice %28 {offsets = [2, 0], sizes = [1, 128], strides = [1, 1]} : vector<4x128xf32> to vector<1x128xf32>
    %42 = vector.broadcast %40 : vector<8x1xf32> to vector<8x128xf32>
    %43 = vector.broadcast %41 : vector<1x128xf32> to vector<8x128xf32>
    %44 = arith.mulf %42, %43 : vector<8x128xf32>
    %45 = arith.addf %39, %44 : vector<8x128xf32>
    %46 = vector.extract_strided_slice %20 {offsets = [0, 3], sizes = [8, 1], strides = [1, 1]} : vector<8x4xf32> to vector<8x1xf32>
    %47 = vector.extract_strided_slice %28 {offsets = [3, 0], sizes = [1, 128], strides = [1, 1]} : vector<4x128xf32> to vector<1x128xf32>
    %48 = vector.broadcast %46 : vector<8x1xf32> to vector<8x128xf32>
    %49 = vector.broadcast %47 : vector<1x128xf32> to vector<8x128xf32>
    %50 = arith.mulf %48, %49 : vector<8x128xf32>
    %51 = arith.addf %45, %50 : vector<8x128xf32>
    %c0_19 = arith.constant 0 : index
    %c0_20 = arith.constant 0 : index
    %52 = vector.load %arg9[%c0_19, %c0_20] : memref<1x128xf32, #tpu.memory_space<vmem>>, vector<1x128xf32>
    %53 = vector.broadcast %27 : vector<8x1xf32> to vector<8x128xf32>
    %54 = vector.broadcast %52 : vector<1x128xf32> to vector<8x128xf32>
    %55 = arith.mulf %53, %54 : vector<8x128xf32>
    %56 = arith.addf %51, %55 : vector<8x128xf32>
    %c0_21 = arith.constant 0 : index
    %c0_22 = arith.constant 0 : index
    %57 = vector.load %arg10[%c0_21, %c0_22] : memref<1x128xf32, #tpu.memory_space<vmem>>, vector<1x128xf32>
    %58 = vector.broadcast %57 : vector<1x128xf32> to vector<8x128xf32>
    %59 = arith.addf %56, %58 : vector<8x128xf32>
    %60 = arith.addf %19, %59 : vector<8x128xf32>
    %c0_23 = arith.constant 0 : index
    %c0_24 = arith.constant 0 : index
    %61 = vector.load %arg11[%c0_23, %c0_24] : memref<8x128xf32, #tpu.memory_space<vmem>>, vector<8x128xf32>
    tpu.vector_store %arg11[%c0_23, %c0_24], %60 {strides = array<i32>} : memref<8x128xf32, #tpu.memory_space<vmem>>, vector<8x128xf32>,
    return
  }
  func.func @transform_0(%arg0: i32) -> (i32, i32) {
    %c0_i32 = arith.constant 0 : i32
    %c0_i32_0 = arith.constant 0 : i32
    return %arg0, %c0_i32 : i32, i32
  }
  func.func @transform_1(%arg0: i32) -> (i32, i32) {
    %c0_i32 = arith.constant 0 : i32
    %c0_i32_0 = arith.constant 0 : i32
    return %arg0, %c0_i32 : i32, i32
  }
  func.func @transform_2(%arg0: i32) -> (i32, i32) {
    %c0_i32 = arith.constant 0 : i32
    %c0_i32_0 = arith.constant 0 : i32
    %c0_i32_1 = arith.constant 0 : i32
    return %c0_i32, %c0_i32_0 : i32, i32
  }
  func.func @transform_3(%arg0: i32) -> (i32, i32) {
    %c0_i32 = arith.constant 0 : i32
    %c0_i32_0 = arith.constant 0 : i32
    %c0_i32_1 = arith.constant 0 : i32
    return %c0_i32, %c0_i32_0 : i32, i32
  }
  func.func @transform_4(%arg0: i32) -> (i32, i32) {
    %c0_i32 = arith.constant 0 : i32
    %c0_i32_0 = arith.constant 0 : i32
    %c0_i32_1 = arith.constant 0 : i32
    return %c0_i32, %c0_i32_0 : i32, i32
  }
  func.func @transform_5(%arg0: i32) -> (i32, i32) {
    %c0_i32 = arith.constant 0 : i32
    %c0_i32_0 = arith.constant 0 : i32
    %c0_i32_1 = arith.constant 0 : i32
    return %c0_i32, %c0_i32_0 : i32, i32
  }
  func.func @transform_6(%arg0: i32) -> (i32, i32) {
    %c0_i32 = arith.constant 0 : i32
    %c0_i32_0 = arith.constant 0 : i32
    %c0_i32_1 = arith.constant 0 : i32
    return %c0_i32, %c0_i32_0 : i32, i32
  }
  func.func @transform_7(%arg0: i32) -> (i32, i32) {
    %c0_i32 = arith.constant 0 : i32
    %c0_i32_0 = arith.constant 0 : i32
    %c0_i32_1 = arith.constant 0 : i32
    return %c0_i32, %c0_i32_0 : i32, i32
  }
  func.func @transform_8(%arg0: i32) -> (i32, i32) {
    %c0_i32 = arith.constant 0 : i32
    %c0_i32_0 = arith.constant 0 : i32
    %c0_i32_1 = arith.constant 0 : i32
    return %c0_i32, %c0_i32_0 : i32, i32
  }
  func.func @transform_9(%arg0: i32) -> (i32, i32) {
    %c0_i32 = arith.constant 0 : i32
    %c0_i32_0 = arith.constant 0 : i32
    %c0_i32_1 = arith.constant 0 : i32
    return %c0_i32, %c0_i32_0 : i32, i32
  }
  func.func @transform_10(%arg0: i32) -> (i32, i32) {
    %c0_i32 = arith.constant 0 : i32
    %c0_i32_0 = arith.constant 0 : i32
    return %arg0, %c0_i32 : i32, i32
  }
}

</mosaic_0001>

<llo_original>
// kernel: classifier_forward.1
$region0: #{classifier_forward.1}
  #allocation0 [shape = 'u32[]', space=smem, size = 0x4, offset = 0x4, fixed_abs, tag = 'smem constant byte address 0x4 - core index']
  #allocation1 [shape = 'u32[72,128]{1,0:T(1,128)}', space=vmem, size = 0x9000, scoped, tag = 'internal scratch']
  %s0 = inlined_call_operand.vmem [shape: f32[2,1024], index: 0, kind: input, shape index: {}]
  %s1 = inlined_call_operand.vmem [shape: f32[2,4], index: 1, kind: input, shape index: {}]
  %s2 = inlined_call_operand.hbm [shape: bf16[1024,128], index: 2, kind: input, shape index: {}]
  %s3 = inlined_call_operand.vmem [shape: f32[1,128], index: 3, kind: input, shape index: {}]
  %s4 = inlined_call_operand.vmem [shape: bf16[128,128], index: 4, kind: input, shape index: {}]
  %s5 = inlined_call_operand.vmem [shape: f32[1,128], index: 5, kind: input, shape index: {}]
  %s6 = inlined_call_operand.vmem [shape: bf16[128,128], index: 6, kind: input, shape index: {}]
  %s7 = inlined_call_operand.vmem [shape: f32[4,128], index: 7, kind: input, shape index: {}]
  %s8 = inlined_call_operand.vmem [shape: f32[1,128], index: 8, kind: input, shape index: {}]
  %s9 = inlined_call_operand.vmem [shape: f32[1,128], index: 9, kind: input, shape index: {}]
  %s10 = inlined_call_operand.hbm [shape: f32[2,128], index: 10, kind: output, shape index: {}]
  %s11 = sld [smem:[#allocation0]]
  $region54: #{classifier_forward.1} parent=0
    _
  %s13 = ssub.s32 1, %s11
  %s14 = scalar_select 0, %s13, %s11
  $region1: #{classifier_forward.1} parent=0
    #allocation2 [shape = 'u8[262144]{0}', space=vmem, size = 0x40000, scoped, tag = 'input window, operand 2, single buffered']
    #allocation3 [shape = 's32[1]{0}', space=sflag, size = 0x4, scoped, tag = 'scoped memory for classifier_forward.1']
    #allocation4 [shape = 's32[1]{0}', space=sflag, size = 0x4, scoped, tag = 'scoped memory for classifier_forward.1']
    #allocation5 [shape = 'u8[4096]{0}', space=vmem, size = 0x1000, scoped, tag = 'output window, operand 0, single buffered']
    %15 = vsyncpa [#allocation3], 0
    %16 = vsyncpa [#allocation4], 0
    // Predicated region
    $region2: #{classifier_forward.1} parent=1 // pred_check
      _
    $region3: #{classifier_forward.1} parent=1 // pred_check_branch
      %18 = sbr.rel (0) target = $region5
    $region4: #{classifier_forward.1} parent=1 // pred_region
      _
    $region5: #{classifier_forward.1} parent=1 // pred_fallthru
      _
    // Predicated region
    $region6: #{classifier_forward.1} parent=1 // pred_check
      _
    $region7: #{classifier_forward.1} parent=1 // pred_check_branch
      %20 = sbr.rel (0) target = $region9
    $region8: #{classifier_forward.1} parent=1 // pred_region
      _
    $region9: #{classifier_forward.1} parent=1 // pred_fallthru
      _
    // Predicated region
    $region10: #{classifier_forward.1} parent=1 // pred_check
      _
    $region11: #{classifier_forward.1} parent=1 // pred_check_branch
      %22 = sbr.rel (0) target = $region13
    $region12: #{classifier_forward.1} parent=1 // pred_region
      %24 = vsyncadd [#allocation3], 0
      %s25 = sshll.u32 %s2, 4
      %s26 = int_to_ptr.hbm [resolvable:$true] %s25
      %s27 = sshll.u32 [#allocation2], 4
      %s28 = int_to_ptr.vmem [resolvable:$true] %s27
      %33 = dma.hbm_to_vmem [thread:$0]  %s26, 8192, %s28, [#allocation3], 64, 64, 4
    $region13: #{classifier_forward.1} parent=1 // pred_fallthru
      _
    // Predicated region
    $region14: #{classifier_forward.1} parent=1 // pred_check
      _
    $region15: #{classifier_forward.1} parent=1 // pred_check_branch
      %35 = sbr.rel (0) target = $region17
    $region16: #{classifier_forward.1} parent=1 // pred_region
      _
    $region17: #{classifier_forward.1} parent=1 // pred_fallthru
      _
    // Predicated region
    $region18: #{classifier_forward.1} parent=1 // pred_check
      _
    $region19: #{classifier_forward.1} parent=1 // pred_check_branch
      %37 = sbr.rel (0) target = $region21
    $region20: #{classifier_forward.1} parent=1 // pred_region
      _
    $region21: #{classifier_forward.1} parent=1 // pred_fallthru
      _
    // Predicated region
    $region22: #{classifier_forward.1} parent=1 // pred_check
      _
    $region23: #{classifier_forward.1} parent=1 // pred_check_branch
      %39 = sbr.rel (0) target = $region25
    $region24: #{classifier_forward.1} parent=1 // pred_region
      _
    $region25: #{classifier_forward.1} parent=1 // pred_fallthru
      _
    // Predicated region
    $region26: #{classifier_forward.1} parent=1 // pred_check
      _
    $region27: #{classifier_forward.1} parent=1 // pred_check_branch
      %41 = sbr.rel (0) target = $region29
    $region28: #{classifier_forward.1} parent=1 // pred_region
      _
    $region29: #{classifier_forward.1} parent=1 // pred_fallthru
      _
    // Predicated region
    $region30: #{classifier_forward.1} parent=1 // pred_check
      _
    $region31: #{classifier_forward.1} parent=1 // pred_check_branch
      %43 = sbr.rel (0) target = $region33
    $region32: #{classifier_forward.1} parent=1 // pred_region
      _
    $region33: #{classifier_forward.1} parent=1 // pred_fallthru
      _
    // Predicated region
    $region34: #{classifier_forward.1} parent=1 // pred_check
      _
    $region35: #{classifier_forward.1} parent=1 // pred_check_branch
      %45 = sbr.rel (0) target = $region37
    $region36: #{classifier_forward.1} parent=1 // pred_region
      _
    $region37: #{classifier_forward.1} parent=1 // pred_fallthru
      _
    // Predicated region
    $region38: #{classifier_forward.1} parent=1 // pred_check
      _
    $region39: #{classifier_forward.1} parent=1 // pred_check_branch
      %47 = sbr.rel (0) target = $region41
    $region40: #{classifier_forward.1} parent=1 // pred_region
      _
    $region41: #{classifier_forward.1} parent=1 // pred_fallthru
      _
    // Predicated region
    $region42: #{classifier_forward.1} parent=1 // pred_check
      _
    $region43: #{classifier_forward.1} parent=1 // pred_check_branch
      %49 = sbr.rel (0) target = $region45
    $region44: #{classifier_forward.1} parent=1 // pred_region
      %51 = dma.done [#allocation3], 8192
    $region45: #{classifier_forward.1} parent=1 // pred_fallthru
      _
    %v52 = vld [vmem:[%s0] sm:$0xff]
    %v53 = vld [vmem:[%s0 + $0x8] sm:$0xff]
    %v54 = vld [vmem:[%s0 + $0x10] sm:$0xff]
    %v55 = vld [vmem:[%s0 + $0x18] sm:$0xff]
    %v56 = vld [vmem:[%s0 + $0x20] sm:$0xff]
    %v57 = vld [vmem:[%s0 + $0x28] sm:$0xff]
    %v58 = vld [vmem:[%s0 + $0x30] sm:$0xff]
    %v59 = vld [vmem:[%s0 + $0x38] sm:$0xff]
    %68 = vst [vmem:[#allocation1] ss:$4 sm:$0xff] %v52
    %s69 = scalar_lea.vmem [#allocation1], 1
    %70 = vst [vmem:[%s69] ss:$4 sm:$0xff] %v54
    %s71 = scalar_lea.vmem [#allocation1], 2
    %72 = vst [vmem:[%s71] ss:$4 sm:$0xff] %v56
    %s73 = scalar_lea.vmem [#allocation1], 3
    %74 = vst [vmem:[%s73] ss:$4 sm:$0xff] %v58
    %s75 = scalar_lea.vmem [#allocation1], 32
    %76 = vst [vmem:[%s75] ss:$4 sm:$0xff] %v53
    %s77 = scalar_lea.vmem [#allocation1], 33
    %78 = vst [vmem:[%s77] ss:$4 sm:$0xff] %v55
    %s79 = scalar_lea.vmem [#allocation1], 34
    %80 = vst [vmem:[%s79] ss:$4 sm:$0xff] %v57
    %s81 = scalar_lea.vmem [#allocation1], 35
    %82 = vst [vmem:[%s81] ss:$4 sm:$0xff] %v59
    %v83 = vld.sshfl [vmem:[#allocation1] sm:$0xff pattern:$0x73625140]
    %v84 = vld.sshfl [vmem:[#allocation1 + $0x8] sm:$0xff pattern:$0x73625140]
    %v85 = vld.sshfl [vmem:[#allocation1 + $0x10] sm:$0xff pattern:$0x73625140]
    %v86 = vld.sshfl [vmem:[#allocation1 + $0x18] sm:$0xff pattern:$0x73625140]
    %v87 = vld.sshfl [vmem:[#allocation1 + $0x20] sm:$0xff pattern:$0x73625140]
    %v88 = vld.sshfl [vmem:[#allocation1 + $0x28] sm:$0xff pattern:$0x73625140]
    %v89 = vld.sshfl [vmem:[#allocation1 + $0x30] sm:$0xff pattern:$0x73625140]
    %v90 = vld.sshfl [vmem:[#allocation1 + $0x38] sm:$0xff pattern:$0x73625140]
    %v99 = vpack.c.bf16 %v83, %v83
    %v100 = vpack.c.bf16 %v84, %v84
    %v101 = vpack.c.bf16 %v85, %v85
    %v102 = vpack.c.bf16 %v86, %v86
    %v103 = vpack.c.bf16 %v87, %v87
    %v104 = vpack.c.bf16 %v88, %v88
    %v105 = vpack.c.bf16 %v89, %v89
    %v106 = vpack.c.bf16 %v90, %v90
    %v107 = vld [vmem:[#allocation2] sm:$0xf]
    %v108 = vld [vmem:[#allocation2 + $0x4] sm:$0xf]
    %v109 = vld [vmem:[#allocation2 + $0x8] sm:$0xf]
    %v110 = vld [vmem:[#allocation2 + $0xc] sm:$0xf]
    %v111 = vld [vmem:[#allocation2 + $0x10] sm:$0xf]
    %v112 = vld [vmem:[#allocation2 + $0x14] sm:$0xf]
    %v113 = vld [vmem:[#allocation2 + $0x18] sm:$0xf]
    %v114 = vld [vmem:[#allocation2 + $0x1c] sm:$0xf]
    %v115 = vld [vmem:[#allocation2 + $0x20] sm:$0xf]
    %v116 = vld [vmem:[#allocation2 + $0x24] sm:$0xf]
    %v117 = vld [vmem:[#allocation2 + $0x28] sm:$0xf]
    %v118 = vld [vmem:[#allocation2 + $0x2c] sm:$0xf]
    %v119 = vld [vmem:[#allocation2 + $0x30] sm:$0xf]
    %v120 = vld [vmem:[#allocation2 + $0x34] sm:$0xf]
    %v121 = vld [vmem:[#allocation2 + $0x38] sm:$0xf]
    %v122 = vld [vmem:[#allocation2 + $0x3c] sm:$0xf]
    %v123 = vld [vmem:[#allocation2 + $0x40] sm:$0xf]
    %v124 = vld [vmem:[#allocation2 + $0x44] sm:$0xf]
    %v125 = vld [vmem:[#allocation2 + $0x48] sm:$0xf]
    %v126 = vld [vmem:[#allocation2 + $0x4c] sm:$0xf]
    %v127 = vld [vmem:[#allocation2 + $0x50] sm:$0xf]
    %v128 = vld [vmem:[#allocation2 + $0x54] sm:$0xf]
    %v129 = vld [vmem:[#allocation2 + $0x58] sm:$0xf]
    %v130 = vld [vmem:[#allocation2 + $0x5c] sm:$0xf]
    %v131 = vld [vmem:[#allocation2 + $0x60] sm:$0xf]
    %v132 = vld [vmem:[#allocation2 + $0x64] sm:$0xf]
    %v133 = vld [vmem:[#allocation2 + $0x68] sm:$0xf]
    %v134 = vld [vmem:[#allocation2 + $0x6c] sm:$0xf]
    %v135 = vld [vmem:[#allocation2 + $0x70] sm:$0xf]
    %v136 = vld [vmem:[#allocation2 + $0x74] sm:$0xf]
    %v137 = vld [vmem:[#allocation2 + $0x78] sm:$0xf]
    %v138 = vld [vmem:[#allocation2 + $0x7c] sm:$0xf]
    %v139 = vld [vmem:[#allocation2 + $0x80] sm:$0xf]
    %v140 = vld [vmem:[#allocation2 + $0x84] sm:$0xf]
    %v141 = vld [vmem:[#allocation2 + $0x88] sm:$0xf]
    %v142 = vld [vmem:[#allocation2 + $0x8c] sm:$0xf]
    %v143 = vld [vmem:[#allocation2 + $0x90] sm:$0xf]
    %v144 = vld [vmem:[#allocation2 + $0x94] sm:$0xf]
    %v145 = vld [vmem:[#allocation2 + $0x98] sm:$0xf]
    %v146 = vld [vmem:[#allocation2 + $0x9c] sm:$0xf]
    %v147 = vld [vmem:[#allocation2 + $0xa0] sm:$0xf]
    %v148 = vld [vmem:[#allocation2 + $0xa4] sm:$0xf]
    %v149 = vld [vmem:[#allocation2 + $0xa8] sm:$0xf]
    %v150 = vld [vmem:[#allocation2 + $0xac] sm:$0xf]
    %v151 = vld [vmem:[#allocation2 + $0xb0] sm:$0xf]
    %v152 = vld [vmem:[#allocation2 + $0xb4] sm:$0xf]
    %v153 = vld [vmem:[#allocation2 + $0xb8] sm:$0xf]
    %v154 = vld [vmem:[#allocation2 + $0xbc] sm:$0xf]
    %v155 = vld [vmem:[#allocation2 + $0xc0] sm:$0xf]
    %v156 = vld [vmem:[#allocation2 + $0xc4] sm:$0xf]
    %v157 = vld [vmem:[#allocation2 + $0xc8] sm:$0xf]
    %v158 = vld [vmem:[#allocation2 + $0xcc] sm:$0xf]
    %v159 = vld [vmem:[#allocation2 + $0xd0] sm:$0xf]
    %v160 = vld [vmem:[#allocation2 + $0xd4] sm:$0xf]
    %v161 = vld [vmem:[#allocation2 + $0xd8] sm:$0xf]
    %v162 = vld [vmem:[#allocation2 + $0xdc] sm:$0xf]
    %v163 = vld [vmem:[#allocation2 + $0xe0] sm:$0xf]
    %v164 = vld [vmem:[#allocation2 + $0xe4] sm:$0xf]
    %v165 = vld [vmem:[#allocation2 + $0xe8] sm:$0xf]
    %v166 = vld [vmem:[#allocation2 + $0xec] sm:$0xf]
    %v167 = vld [vmem:[#allocation2 + $0xf0] sm:$0xf]
    %v168 = vld [vmem:[#allocation2 + $0xf4] sm:$0xf]
    %v169 = vld [vmem:[#allocation2 + $0xf8] sm:$0xf]
    %v170 = vld [vmem:[#allocation2 + $0xfc] sm:$0xf]
    %v171 = vld [vmem:[#allocation2 + $0x100] sm:$0xf]
    %v172 = vld [vmem:[#allocation2 + $0x104] sm:$0xf]
    %v173 = vld [vmem:[#allocation2 + $0x108] sm:$0xf]
    %v174 = vld [vmem:[#allocation2 + $0x10c] sm:$0xf]
    %v175 = vld [vmem:[#allocation2 + $0x110] sm:$0xf]
    %v176 = vld [vmem:[#allocation2 + $0x114] sm:$0xf]
    %v177 = vld [vmem:[#allocation2 + $0x118] sm:$0xf]
    %v178 = vld [vmem:[#allocation2 + $0x11c] sm:$0xf]
    %v179 = vld [vmem:[#allocation2 + $0x120] sm:$0xf]
    %v180 = vld [vmem:[#allocation2 + $0x124] sm:$0xf]
    %v181 = vld [vmem:[#allocation2 + $0x128] sm:$0xf]
    %v182 = vld [vmem:[#allocation2 + $0x12c] sm:$0xf]
    %v183 = vld [vmem:[#allocation2 + $0x130] sm:$0xf]
    %v184 = vld [vmem:[#allocation2 + $0x134] sm:$0xf]
    %v185 = vld [vmem:[#allocation2 + $0x138] sm:$0xf]
    %v186 = vld [vmem:[#allocation2 + $0x13c] sm:$0xf]
    %v187 = vld [vmem:[#allocation2 + $0x140] sm:$0xf]
    %v188 = vld [vmem:[#allocation2 + $0x144] sm:$0xf]
    %v189 = vld [vmem:[#allocation2 + $0x148] sm:$0xf]
    %v190 = vld [vmem:[#allocation2 + $0x14c] sm:$0xf]
    %v191 = vld [vmem:[#allocation2 + $0x150] sm:$0xf]
    %v192 = vld [vmem:[#allocation2 + $0x154] sm:$0xf]
    %v193 = vld [vmem:[#allocation2 + $0x158] sm:$0xf]
    %v194 = vld [vmem:[#allocation2 + $0x15c] sm:$0xf]
    %v195 = vld [vmem:[#allocation2 + $0x160] sm:$0xf]
    %v196 = vld [vmem:[#allocation2 + $0x164] sm:$0xf]
    %v197 = vld [vmem:[#allocation2 + $0x168] sm:$0xf]
    %v198 = vld [vmem:[#allocation2 + $0x16c] sm:$0xf]
    %v199 = vld [vmem:[#allocation2 + $0x170] sm:$0xf]
    %v200 = vld [vmem:[#allocation2 + $0x174] sm:$0xf]
    %v201 = vld [vmem:[#allocation2 + $0x178] sm:$0xf]
    %v202 = vld [vmem:[#allocation2 + $0x17c] sm:$0xf]
    %v203 = vld [vmem:[#allocation2 + $0x180] sm:$0xf]
    %v204 = vld [vmem:[#allocation2 + $0x184] sm:$0xf]
    %v205 = vld [vmem:[#allocation2 + $0x188] sm:$0xf]
    %v206 = vld [vmem:[#allocation2 + $0x18c] sm:$0xf]
    %v207 = vld [vmem:[#allocation2 + $0x190] sm:$0xf]
    %v208 = vld [vmem:[#allocation2 + $0x194] sm:$0xf]
    %v209 = vld [vmem:[#allocation2 + $0x198] sm:$0xf]
    %v210 = vld [vmem:[#allocation2 + $0x19c] sm:$0xf]
    %v211 = vld [vmem:[#allocation2 + $0x1a0] sm:$0xf]
    %v212 = vld [vmem:[#allocation2 + $0x1a4] sm:$0xf]
    %v213 = vld [vmem:[#allocation2 + $0x1a8] sm:$0xf]
    %v214 = vld [vmem:[#allocation2 + $0x1ac] sm:$0xf]
    %v215 = vld [vmem:[#allocation2 + $0x1b0] sm:$0xf]
    %v216 = vld [vmem:[#allocation2 + $0x1b4] sm:$0xf]
    %v217 = vld [vmem:[#allocation2 + $0x1b8] sm:$0xf]
    %v218 = vld [vmem:[#allocation2 + $0x1bc] sm:$0xf]
    %v219 = vld [vmem:[#allocation2 + $0x1c0] sm:$0xf]
    %v220 = vld [vmem:[#allocation2 + $0x1c4] sm:$0xf]
    %v221 = vld [vmem:[#allocation2 + $0x1c8] sm:$0xf]
    %v222 = vld [vmem:[#allocation2 + $0x1cc] sm:$0xf]
    %v223 = vld [vmem:[#allocation2 + $0x1d0] sm:$0xf]
    %v224 = vld [vmem:[#allocation2 + $0x1d4] sm:$0xf]
    %v225 = vld [vmem:[#allocation2 + $0x1d8] sm:$0xf]
    %v226 = vld [vmem:[#allocation2 + $0x1dc] sm:$0xf]
    %v227 = vld [vmem:[#allocation2 + $0x1e0] sm:$0xf]
    %v228 = vld [vmem:[#allocation2 + $0x1e4] sm:$0xf]
    %v229 = vld [vmem:[#allocation2 + $0x1e8] sm:$0xf]
    %v230 = vld [vmem:[#allocation2 + $0x1ec] sm:$0xf]
    %v231 = vld [vmem:[#allocation2 + $0x1f0] sm:$0xf]
    %v232 = vld [vmem:[#allocation2 + $0x1f4] sm:$0xf]
    %v233 = vld [vmem:[#allocation2 + $0x1f8] sm:$0xf]
    %v234 = vld [vmem:[#allocation2 + $0x1fc] sm:$0xf]
    %v235 = vld [vmem:[%s3] sm:$0x1]
    %v237 = vperm.slane %v235, 0
    %v367 = vunpack.c.l.b16 %v107
    %v368 = vunpack.c.l.b16 %v108
    %v369 = vunpack.c.l.b16 %v109
    %v370 = vunpack.c.l.b16 %v110
    %v371 = vunpack.c.l.b16 %v111
    %v372 = vunpack.c.l.b16 %v112
    %v373 = vunpack.c.l.b16 %v113
    %v374 = vunpack.c.l.b16 %v114
    %v375 = vunpack.c.l.b16 %v115
    %v376 = vunpack.c.l.b16 %v116
    %v377 = vunpack.c.l.b16 %v117
    %v378 = vunpack.c.l.b16 %v118
    %v379 = vunpack.c.l.b16 %v119
    %v380 = vunpack.c.l.b16 %v120
    %v381 = vunpack.c.l.b16 %v121
    %v382 = vunpack.c.l.b16 %v122
    %v383 = vunpack.c.l.b16 %v123
    %v384 = vunpack.c.l.b16 %v124
    %v385 = vunpack.c.l.b16 %v125
    %v386 = vunpack.c.l.b16 %v126
    %v387 = vunpack.c.l.b16 %v127
    %v388 = vunpack.c.l.b16 %v128
    %v389 = vunpack.c.l.b16 %v129
    %v390 = vunpack.c.l.b16 %v130
    %v391 = vunpack.c.l.b16 %v131
    %v392 = vunpack.c.l.b16 %v132
    %v393 = vunpack.c.l.b16 %v133
    %v394 = vunpack.c.l.b16 %v134
    %v395 = vunpack.c.l.b16 %v135
    %v396 = vunpack.c.l.b16 %v136
    %v397 = vunpack.c.l.b16 %v137
    %v398 = vunpack.c.l.b16 %v138
    %v399 = vunpack.c.l.b16 %v139
    %v400 = vunpack.c.l.b16 %v140
    %v401 = vunpack.c.l.b16 %v141
    %v402 = vunpack.c.l.b16 %v142
    %v403 = vunpack.c.l.b16 %v143
    %v404 = vunpack.c.l.b16 %v144
    %v405 = vunpack.c.l.b16 %v145
    %v406 = vunpack.c.l.b16 %v146
    %v407 = vunpack.c.l.b16 %v147
    %v408 = vunpack.c.l.b16 %v148
    %v409 = vunpack.c.l.b16 %v149
    %v410 = vunpack.c.l.b16 %v150
    %v411 = vunpack.c.l.b16 %v151
    %v412 = vunpack.c.l.b16 %v152
    %v413 = vunpack.c.l.b16 %v153
    %v414 = vunpack.c.l.b16 %v154
    %v415 = vunpack.c.l.b16 %v155
    %v416 = vunpack.c.l.b16 %v156
    %v417 = vunpack.c.l.b16 %v157
    %v418 = vunpack.c.l.b16 %v158
    %v419 = vunpack.c.l.b16 %v159
    %v420 = vunpack.c.l.b16 %v160
    %v421 = vunpack.c.l.b16 %v161
    %v422 = vunpack.c.l.b16 %v162
    %v423 = vunpack.c.l.b16 %v163
    %v424 = vunpack.c.l.b16 %v164
    %v425 = vunpack.c.l.b16 %v165
    %v426 = vunpack.c.l.b16 %v166
    %v427 = vunpack.c.l.b16 %v167
    %v428 = vunpack.c.l.b16 %v168
    %v429 = vunpack.c.l.b16 %v169
    %v430 = vunpack.c.l.b16 %v170
    %v431 = vunpack.c.l.b16 %v171
    %v432 = vunpack.c.l.b16 %v172
    %v433 = vunpack.c.l.b16 %v173
    %v434 = vunpack.c.l.b16 %v174
    %v435 = vunpack.c.l.b16 %v175
    %v436 = vunpack.c.l.b16 %v176
    %v437 = vunpack.c.l.b16 %v177
    %v438 = vunpack.c.l.b16 %v178
    %v439 = vunpack.c.l.b16 %v179
    %v440 = vunpack.c.l.b16 %v180
    %v441 = vunpack.c.l.b16 %v181
    %v442 = vunpack.c.l.b16 %v182
    %v443 = vunpack.c.l.b16 %v183
    %v444 = vunpack.c.l.b16 %v184
    %v445 = vunpack.c.l.b16 %v185
    %v446 = vunpack.c.l.b16 %v186
    %v447 = vunpack.c.l.b16 %v187
    %v448 = vunpack.c.l.b16 %v188
    %v449 = vunpack.c.l.b16 %v189
    %v450 = vunpack.c.l.b16 %v190
    %v451 = vunpack.c.l.b16 %v191
    %v452 = vunpack.c.l.b16 %v192
    %v453 = vunpack.c.l.b16 %v193
    %v454 = vunpack.c.l.b16 %v194
    %v455 = vunpack.c.l.b16 %v195
    %v456 = vunpack.c.l.b16 %v196
    %v457 = vunpack.c.l.b16 %v197
    %v458 = vunpack.c.l.b16 %v198
    %v459 = vunpack.c.l.b16 %v199
    %v460 = vunpack.c.l.b16 %v200
    %v461 = vunpack.c.l.b16 %v201
    %v462 = vunpack.c.l.b16 %v202
    %v463 = vunpack.c.l.b16 %v203
    %v464 = vunpack.c.l.b16 %v204
    %v465 = vunpack.c.l.b16 %v205
    %v466 = vunpack.c.l.b16 %v206
    %v467 = vunpack.c.l.b16 %v207
    %v468 = vunpack.c.l.b16 %v208
    %v469 = vunpack.c.l.b16 %v209
    %v470 = vunpack.c.l.b16 %v210
    %v471 = vunpack.c.l.b16 %v211
    %v472 = vunpack.c.l.b16 %v212
    %v473 = vunpack.c.l.b16 %v213
    %v474 = vunpack.c.l.b16 %v214
    %v475 = vunpack.c.l.b16 %v215
    %v476 = vunpack.c.l.b16 %v216
    %v477 = vunpack.c.l.b16 %v217
    %v478 = vunpack.c.l.b16 %v218
    %v479 = vunpack.c.l.b16 %v219
    %v480 = vunpack.c.l.b16 %v220
    %v481 = vunpack.c.l.b16 %v221
    %v482 = vunpack.c.l.b16 %v222
    %v483 = vunpack.c.l.b16 %v223
    %v484 = vunpack.c.l.b16 %v224
    %v485 = vunpack.c.l.b16 %v225
    %v486 = vunpack.c.l.b16 %v226
    %v487 = vunpack.c.l.b16 %v227
    %v488 = vunpack.c.l.b16 %v228
    %v489 = vunpack.c.l.b16 %v229
    %v490 = vunpack.c.l.b16 %v230
    %v491 = vunpack.c.l.b16 %v231
    %v492 = vunpack.c.l.b16 %v232
    %v493 = vunpack.c.l.b16 %v233
    %v494 = vunpack.c.l.b16 %v234
    %v495 = vpack.c.b16 %v368, %v367
    %v496 = vpack.c.b16 %v370, %v369
    %v497 = vpack.c.b16 %v372, %v371
    %v498 = vpack.c.b16 %v374, %v373
    %v499 = vpack.c.b16 %v376, %v375
    %v500 = vpack.c.b16 %v378, %v377
    %v501 = vpack.c.b16 %v380, %v379
    %v502 = vpack.c.b16 %v382, %v381
    %v503 = vpack.c.b16 %v384, %v383
    %v504 = vpack.c.b16 %v386, %v385
    %v505 = vpack.c.b16 %v388, %v387
    %v506 = vpack.c.b16 %v390, %v389
    %v507 = vpack.c.b16 %v392, %v391
    %v508 = vpack.c.b16 %v394, %v393
    %v509 = vpack.c.b16 %v396, %v395
    %v510 = vpack.c.b16 %v398, %v397
    %v511 = vpack.c.b16 %v400, %v399
    %v512 = vpack.c.b16 %v402, %v401
    %v513 = vpack.c.b16 %v404, %v403
    %v514 = vpack.c.b16 %v406, %v405
    %v515 = vpack.c.b16 %v408, %v407
    %v516 = vpack.c.b16 %v410, %v409
    %v517 = vpack.c.b16 %v412, %v411
    %v518 = vpack.c.b16 %v414, %v413
    %v519 = vpack.c.b16 %v416, %v415
    %v520 = vpack.c.b16 %v418, %v417
    %v521 = vpack.c.b16 %v420, %v419
    %v522 = vpack.c.b16 %v422, %v421
    %v523 = vpack.c.b16 %v424, %v423
    %v524 = vpack.c.b16 %v426, %v425
    %v525 = vpack.c.b16 %v428, %v427
    %v526 = vpack.c.b16 %v430, %v429
    %v527 = vpack.c.b16 %v432, %v431
    %v528 = vpack.c.b16 %v434, %v433
    %v529 = vpack.c.b16 %v436, %v435
    %v530 = vpack.c.b16 %v438, %v437
    %v531 = vpack.c.b16 %v440, %v439
    %v532 = vpack.c.b16 %v442, %v441
    %v533 = vpack.c.b16 %v444, %v443
    %v534 = vpack.c.b16 %v446, %v445
    %v535 = vpack.c.b16 %v448, %v447
    %v536 = vpack.c.b16 %v450, %v449
    %v537 = vpack.c.b16 %v452, %v451
    %v538 = vpack.c.b16 %v454, %v453
    %v539 = vpack.c.b16 %v456, %v455
    %v540 = vpack.c.b16 %v458, %v457
    %v541 = vpack.c.b16 %v460, %v459
    %v542 = vpack.c.b16 %v462, %v461
    %v543 = vpack.c.b16 %v464, %v463
    %v544 = vpack.c.b16 %v466, %v465
    %v545 = vpack.c.b16 %v468, %v467
    %v546 = vpack.c.b16 %v470, %v469
    %v547 = vpack.c.b16 %v472, %v471
    %v548 = vpack.c.b16 %v474, %v473
    %v549 = vpack.c.b16 %v476, %v475
    %v550 = vpack.c.b16 %v478, %v477
    %v551 = vpack.c.b16 %v480, %v479
    %v552 = vpack.c.b16 %v482, %v481
    %v553 = vpack.c.b16 %v484, %v483
    %v554 = vpack.c.b16 %v486, %v485
    %v555 = vpack.c.b16 %v488, %v487
    %v556 = vpack.c.b16 %v490, %v489
    %v557 = vpack.c.b16 %v492, %v491
    %v558 = vpack.c.b16 %v494, %v493
    %623 = vmatpush.bf16.msra.mxu0 %v502
    %624 = vmatpush.bf16.msra.mxu0 %v501
    %625 = vmatpush.bf16.msra.mxu0 %v500
    %626 = vmatpush.bf16.msra.mxu0 %v499
    %627 = vmatpush.bf16.msra.mxu0 %v498
    %628 = vmatpush.bf16.msra.mxu0 %v497
    %629 = vmatpush.bf16.msra.mxu0 %v496
    %630 = vmatpush.bf16.msra.mxu0 %v495
    %631 = vmatmul.bf16.gmra.mxu0 %v99
    %v632 = vpop.f32.mrf.mxu0
    %v633 = vadd.f32 %v237, %v632
    %v634 = vpop.f32.mrf.mxu0
    %635 = vdwg.mxu0
    %636 = vmatpush.bf16.msra.mxu0 %v510
    %637 = vmatpush.bf16.msra.mxu0 %v509
    %638 = vmatpush.bf16.msra.mxu0 %v508
    %639 = vmatpush.bf16.msra.mxu0 %v507
    %640 = vmatpush.bf16.msra.mxu0 %v506
    %641 = vmatpush.bf16.msra.mxu0 %v505
    %642 = vmatpush.bf16.msra.mxu0 %v504
    %643 = vmatpush.bf16.msra.mxu0 %v503
    %644 = vmatmul.bf16.gmra.mxu0 %v100
    %v645 = vpop.f32.mrf.mxu0
    %v646 = vadd.f32 %v633, %v645
    %v647 = vpop.f32.mrf.mxu0
    %648 = vdwg.mxu0
    %649 = vmatpush.bf16.msra.mxu0 %v518
    %650 = vmatpush.bf16.msra.mxu0 %v517
    %651 = vmatpush.bf16.msra.mxu0 %v516
    %652 = vmatpush.bf16.msra.mxu0 %v515
    %653 = vmatpush.bf16.msra.mxu0 %v514
    %654 = vmatpush.bf16.msra.mxu0 %v513
    %655 = vmatpush.bf16.msra.mxu0 %v512
    %656 = vmatpush.bf16.msra.mxu0 %v511
    %657 = vmatmul.bf16.gmra.mxu0 %v101
    %v658 = vpop.f32.mrf.mxu0
    %v659 = vadd.f32 %v646, %v658
    %v660 = vpop.f32.mrf.mxu0
    %661 = vdwg.mxu0
    %662 = vmatpush.bf16.msra.mxu0 %v526
    %663 = vmatpush.bf16.msra.mxu0 %v525
    %664 = vmatpush.bf16.msra.mxu0 %v524
    %665 = vmatpush.bf16.msra.mxu0 %v523
    %666 = vmatpush.bf16.msra.mxu0 %v522
    %667 = vmatpush.bf16.msra.mxu0 %v521
    %668 = vmatpush.bf16.msra.mxu0 %v520
    %669 = vmatpush.bf16.msra.mxu0 %v519
    %670 = vmatmul.bf16.gmra.mxu0 %v102
    %v671 = vpop.f32.mrf.mxu0
    %v672 = vadd.f32 %v659, %v671
    %v673 = vpop.f32.mrf.mxu0
    %674 = vdwg.mxu0
    %675 = vmatpush.bf16.msra.mxu0 %v534
    %676 = vmatpush.bf16.msra.mxu0 %v533
    %677 = vmatpush.bf16.msra.mxu0 %v532
    %678 = vmatpush.bf16.msra.mxu0 %v531
    %679 = vmatpush.bf16.msra.mxu0 %v530
    %680 = vmatpush.bf16.msra.mxu0 %v529
    %681 = vmatpush.bf16.msra.mxu0 %v528
    %682 = vmatpush.bf16.msra.mxu0 %v527
    %683 = vmatmul.bf16.gmra.mxu0 %v103
    %v684 = vpop.f32.mrf.mxu0
    %v685 = vadd.f32 %v672, %v684
    %v686 = vpop.f32.mrf.mxu0
    %687 = vdwg.mxu0
    %688 = vmatpush.bf16.msra.mxu0 %v542
    %689 = vmatpush.bf16.msra.mxu0 %v541
    %690 = vmatpush.bf16.msra.mxu0 %v540
    %691 = vmatpush.bf16.msra.mxu0 %v539
    %692 = vmatpush.bf16.msra.mxu0 %v538
    %693 = vmatpush.bf16.msra.mxu0 %v537
    %694 = vmatpush.bf16.msra.mxu0 %v536
    %695 = vmatpush.bf16.msra.mxu0 %v535
    %696 = vmatmul.bf16.gmra.mxu0 %v104
    %v697 = vpop.f32.mrf.mxu0
    %v698 = vadd.f32 %v685, %v697
    %v699 = vpop.f32.mrf.mxu0
    %700 = vdwg.mxu0
    %701 = vmatpush.bf16.msra.mxu0 %v550
    %702 = vmatpush.bf16.msra.mxu0 %v549
    %703 = vmatpush.bf16.msra.mxu0 %v548
    %704 = vmatpush.bf16.msra.mxu0 %v547
    %705 = vmatpush.bf16.msra.mxu0 %v546
    %706 = vmatpush.bf16.msra.mxu0 %v545
    %707 = vmatpush.bf16.msra.mxu0 %v544
    %708 = vmatpush.bf16.msra.mxu0 %v543
    %709 = vmatmul.bf16.gmra.mxu0 %v105
    %v710 = vpop.f32.mrf.mxu0
    %v711 = vadd.f32 %v698, %v710
    %v712 = vpop.f32.mrf.mxu0
    %713 = vdwg.mxu0
    %714 = vmatpush.bf16.msra.mxu0 %v558
    %715 = vmatpush.bf16.msra.mxu0 %v557
    %716 = vmatpush.bf16.msra.mxu0 %v556
    %717 = vmatpush.bf16.msra.mxu0 %v555
    %718 = vmatpush.bf16.msra.mxu0 %v554
    %719 = vmatpush.bf16.msra.mxu0 %v553
    %720 = vmatpush.bf16.msra.mxu0 %v552
    %721 = vmatpush.bf16.msra.mxu0 %v551
    %722 = vmatmul.bf16.gmra.mxu0 %v106
    %v723 = vpop.f32.mrf.mxu0
    %v724 = vadd.f32 %v711, %v723
    %v725 = vpop.f32.mrf.mxu0
    %726 = vdwg.mxu0
    %v727 = vmax.f32 %v724, 0.0
    %v728 = vpack.c.bf16 %v727, %v727
    %v729 = vld [vmem:[%s4] sm:$0xf]
    %v730 = vld [vmem:[%s4 + $0x4] sm:$0xf]
    %v731 = vld [vmem:[%s4 + $0x8] sm:$0xf]
    %v732 = vld [vmem:[%s4 + $0xc] sm:$0xf]
    %v733 = vld [vmem:[%s4 + $0x10] sm:$0xf]
    %v734 = vld [vmem:[%s4 + $0x14] sm:$0xf]
    %v735 = vld [vmem:[%s4 + $0x18] sm:$0xf]
    %v736 = vld [vmem:[%s4 + $0x1c] sm:$0xf]
    %v737 = vld [vmem:[%s4 + $0x20] sm:$0xf]
    %v738 = vld [vmem:[%s4 + $0x24] sm:$0xf]
    %v739 = vld [vmem:[%s4 + $0x28] sm:$0xf]
    %v740 = vld [vmem:[%s4 + $0x2c] sm:$0xf]
    %v741 = vld [vmem:[%s4 + $0x30] sm:$0xf]
    %v742 = vld [vmem:[%s4 + $0x34] sm:$0xf]
    %v743 = vld [vmem:[%s4 + $0x38] sm:$0xf]
    %v744 = vld [vmem:[%s4 + $0x3c] sm:$0xf]
    %v745 = vld [vmem:[%s5] sm:$0x1]
    %v747 = vperm.slane %v745, 0
    %v765 = vunpack.c.l.b16 %v729
    %v766 = vunpack.c.l.b16 %v730
    %v767 = vunpack.c.l.b16 %v731
    %v768 = vunpack.c.l.b16 %v732
    %v769 = vunpack.c.l.b16 %v733
    %v770 = vunpack.c.l.b16 %v734
    %v771 = vunpack.c.l.b16 %v735
    %v772 = vunpack.c.l.b16 %v736
    %v773 = vunpack.c.l.b16 %v737
    %v774 = vunpack.c.l.b16 %v738
    %v775 = vunpack.c.l.b16 %v739
    %v776 = vunpack.c.l.b16 %v740
    %v777 = vunpack.c.l.b16 %v741
    %v778 = vunpack.c.l.b16 %v742
    %v779 = vunpack.c.l.b16 %v743
    %v780 = vunpack.c.l.b16 %v744
    %v781 = vpack.c.b16 %v766, %v765
    %v782 = vpack.c.b16 %v768, %v767
    %v783 = vpack.c.b16 %v770, %v769
    %v784 = vpack.c.b16 %v772, %v771
    %v785 = vpack.c.b16 %v774, %v773
    %v786 = vpack.c.b16 %v776, %v775
    %v787 = vpack.c.b16 %v778, %v777
    %v788 = vpack.c.b16 %v780, %v779
    %797 = vmatpush.bf16.msra.mxu0 %v788
    %798 = vmatpush.bf16.msra.mxu0 %v787
    %799 = vmatpush.bf16.msra.mxu0 %v786
    %800 = vmatpush.bf16.msra.mxu0 %v785
    %801 = vmatpush.bf16.msra.mxu0 %v784
    %802 = vmatpush.bf16.msra.mxu0 %v783
    %803 = vmatpush.bf16.msra.mxu0 %v782
    %804 = vmatpush.bf16.msra.mxu0 %v781
    %805 = vmatmul.bf16.gmra.mxu0 %v728
    %v806 = vpop.f32.mrf.mxu0
    %v807 = vadd.f32 %v747, %v806
    %v808 = vpop.f32.mrf.mxu0
    %809 = vdwg.mxu0
    %v810 = vmax.f32 %v807, 0.0
    %v811 = vpack.c.bf16 %v810, %v810
    %v812 = vld [vmem:[%s6] sm:$0xf]
    %v813 = vld [vmem:[%s6 + $0x4] sm:$0xf]
    %v814 = vld [vmem:[%s6 + $0x8] sm:$0xf]
    %v815 = vld [vmem:[%s6 + $0xc] sm:$0xf]
    %v816 = vld [vmem:[%s6 + $0x10] sm:$0xf]
    %v817 = vld [vmem:[%s6 + $0x14] sm:$0xf]
    %v818 = vld [vmem:[%s6 + $0x18] sm:$0xf]
    %v819 = vld [vmem:[%s6 + $0x1c] sm:$0xf]
    %v820 = vld [vmem:[%s6 + $0x20] sm:$0xf]
    %v821 = vld [vmem:[%s6 + $0x24] sm:$0xf]
    %v822 = vld [vmem:[%s6 + $0x28] sm:$0xf]
    %v823 = vld [vmem:[%s6 + $0x2c] sm:$0xf]
    %v824 = vld [vmem:[%s6 + $0x30] sm:$0xf]
    %v825 = vld [vmem:[%s6 + $0x34] sm:$0xf]
    %v826 = vld [vmem:[%s6 + $0x38] sm:$0xf]
    %v827 = vld [vmem:[%s6 + $0x3c] sm:$0xf]
    %v828 = vld [vmem:[%s1] sm:$0xff]
    %830 = vrot.lane.b32.xlu0 %v828, 2
    %v831 = vpop.permute.xlu0 %830
    %v833 = vsub.f32 %v828, %v831
    %835 = vrot.lane.b32.xlu0 %v833, 127
    %v836 = vpop.permute.xlu0 %835
    %v838 = vmul.f32 %v833, %v836
    %v839 = vld [vmem:[%s7] sm:$0xf]
    %840 = vset.pattern.permute.xlu0 0
    %841 = vperm.xlu0 %840, %v828
    %v842 = vpop.permute.xlu0 %841
    %v844 = vperm.slane %v839, 0
    %v845 = vmul.f32 %v842, %v844
    %846 = vset.pattern.permute.xlu0 1
    %847 = vperm.xlu0 %846, %v828
    %v848 = vpop.permute.xlu0 %847
    %v850 = vperm.slane %v839, 1
    %v851 = vmul.f32 %v848, %v850
    %v852 = vadd.f32 %v845, %v851
    %853 = vset.pattern.permute.xlu0 2
    %854 = vperm.xlu0 %853, %v828
    %v855 = vpop.permute.xlu0 %854
    %v857 = vperm.slane %v839, 2
    %v858 = vmul.f32 %v855, %v857
    %v859 = vadd.f32 %v852, %v858
    %860 = vset.pattern.permute.xlu0 3
    %861 = vperm.xlu0 %860, %v828
    %v862 = vpop.permute.xlu0 %861
    %v864 = vperm.slane %v839, 3
    %v865 = vmul.f32 %v862, %v864
    %v866 = vadd.f32 %v859, %v865
    %v867 = vld [vmem:[%s8] sm:$0x1]
    %869 = vset.pattern.permute.xlu0 2
    %870 = vperm.xlu0 %869, %v838
    %v871 = vpop.permute.xlu0 %870
    %v874 = vperm.slane %v867, 0
    %v876 = vmul.f32 %v871, %v874
    %v877 = vadd.f32 %v866, %v876
    %v878 = vld [vmem:[%s9] sm:$0x1]
    %v880 = vperm.slane %v878, 0
    %v882 = vadd.f32 %v877, %v880
    %v899 = vunpack.c.l.b16 %v812
    %v900 = vunpack.c.l.b16 %v813
    %v901 = vunpack.c.l.b16 %v814
    %v902 = vunpack.c.l.b16 %v815
    %v903 = vunpack.c.l.b16 %v816
    %v904 = vunpack.c.l.b16 %v817
    %v905 = vunpack.c.l.b16 %v818
    %v906 = vunpack.c.l.b16 %v819
    %v907 = vunpack.c.l.b16 %v820
    %v908 = vunpack.c.l.b16 %v821
    %v909 = vunpack.c.l.b16 %v822
    %v910 = vunpack.c.l.b16 %v823
    %v911 = vunpack.c.l.b16 %v824
    %v912 = vunpack.c.l.b16 %v825
    %v913 = vunpack.c.l.b16 %v826
    %v914 = vunpack.c.l.b16 %v827
    %v915 = vpack.c.b16 %v900, %v899
    %v916 = vpack.c.b16 %v902, %v901
    %v917 = vpack.c.b16 %v904, %v903
    %v918 = vpack.c.b16 %v906, %v905
    %v919 = vpack.c.b16 %v908, %v907
    %v920 = vpack.c.b16 %v910, %v909
    %v921 = vpack.c.b16 %v912, %v911
    %v922 = vpack.c.b16 %v914, %v913
    %931 = vmatpush.bf16.msra.mxu0 %v922
    %932 = vmatpush.bf16.msra.mxu0 %v921
    %933 = vmatpush.bf16.msra.mxu0 %v920
    %934 = vmatpush.bf16.msra.mxu0 %v919
    %935 = vmatpush.bf16.msra.mxu0 %v918
    %936 = vmatpush.bf16.msra.mxu0 %v917
    %937 = vmatpush.bf16.msra.mxu0 %v916
    %938 = vmatpush.bf16.msra.mxu0 %v915
    %939 = vmatmul.bf16.gmra.mxu0 %v811
    %v940 = vpop.f32.mrf.mxu0
    %v941 = vadd.f32 %v882, %v940
    %v942 = vpop.f32.mrf.mxu0
    %943 = vdwg.mxu0
    %944 = vst [vmem:[#allocation5] sm:$0xff] %v941
    // Predicated region
    $region46: #{classifier_forward.1} parent=1 // pred_check
      _
    $region47: #{classifier_forward.1} parent=1 // pred_check_branch
      %946 = sbr.rel (0) target = $region49
    $region48: #{classifier_forward.1} parent=1 // pred_region
      %948 = vsyncadd [#allocation4], 96
      %s949 = sshll.u32 [#allocation5], 4
      %s950 = int_to_ptr.vmem [resolvable:$true] %s949
      %s951 = sshll.u32 %s10, 4
      %s952 = int_to_ptr.hbm [resolvable:$true] %s951
      %957 = dma.vmem_to_hbm [thread:$0]  %s950, 32, %s952, [#allocation4], 32, 32, 2
    $region49: #{classifier_forward.1} parent=1 // pred_fallthru
      _
    // Predicated region
    $region50: #{classifier_forward.1} parent=1 // pred_check
      _
    $region51: #{classifier_forward.1} parent=1 // pred_check_branch
      %959 = sbr.rel (0) target = $region53
    $region52: #{classifier_forward.1} parent=1 // pred_region
      %961 = dma.done [#allocation4], 128
    $region53: #{classifier_forward.1} parent=1 // pred_fallthru
      _
    %962 = vsyncpa [#allocation3], 1
    %963 = vsyncpa [#allocation4], 1

</llo_original>
